<compile_context>
chip_gen: v7x
topology: tpu7x:2x2x1
jax: 0.10.0
libtpu: 0.0.40
codegen_flags: <defaults>
</compile_context>

<pallas_src>
import functools
import math

import numpy as np
import jax
import jax.numpy as jnp
from jax.experimental import pallas as pl
from jax.experimental.pallas import tpu as pltpu


# ----------------------------- Pallas kernel ------------------------------- #

def _fused_conv_gemm_kernel(cols_ref, w_ref, b_ref, o_ref, *, relu):
    """One grid step = one row tile: (tm, 27*Cin) @ (27*Cin, Cout) on the MXU,
    f32 accumulate, fused bias + ReLU epilogue, single store."""
    y = jnp.dot(cols_ref[...], w_ref[...], preferred_element_type=jnp.float32)
    y = y + b_ref[...]
    if relu:
        y = jnp.maximum(y, 0.0)
    o_ref[...] = y.astype(o_ref.dtype)


def _round_up(x, m):
    return ((x + m - 1) // m) * m


def _choose_row_tile(M, tm_target=1024):
    # Prefer >=2 row tiles so the 'parallel' grid axis can shard across both
    # TensorCores on v7x; keep tm a multiple of 8 (sublane rule on the
    # (tm, Cout) / (tm, K) blocks).
    half = -(-M // 2)
    return max(8, min(tm_target, _round_up(half, 8)))


def conv3d_bias_relu_pallas(x, w, b, *, relu=True, tm_target=1024,
                            compute_dtype=jnp.bfloat16):
    """3x3x3 conv (stride 1, padding 1) + bias + optional ReLU.

    x: (N, D, H, W, Cin) float32 (NDHWC)
    w: (Cout, Cin, 3, 3, 3)      (PyTorch Conv3d weight layout)
    b: (Cout,)
    """
    N, D, H, W, Cin = x.shape
    Cout = w.shape[0]
    M = N * D * H * W
    K = 27 * Cin

    # --- glue (pure data movement): fused-K im2col ------------------------- #
    # TODO(synk): form the 27 shifted windows (and the x2 nearest upsample /
    # channel concat) inside the kernel from a halo'd input slab
    # (memory_space=pl.ANY + manual make_async_copy) to avoid the replicated
    # im2col HBM traffic; for now the replication is halved by the bf16 cast.
    xc = x.astype(compute_dtype)
    xp = jnp.pad(xc, ((0, 0), (1, 1), (1, 1), (1, 1), (0, 0)))
    cols = jnp.concatenate(
        [xp[:, kd:kd + D, kh:kh + H, kw:kw + W, :]
         for kd in range(3) for kh in range(3) for kw in range(3)],
        axis=-1).reshape(M, K)                                  # (M, 27*Cin)
    w_fused = (jnp.transpose(w, (2, 3, 4, 1, 0))
               .reshape(K, Cout).astype(compute_dtype))         # (27*Cin, Cout)
    b2 = b.reshape(1, Cout).astype(jnp.float32)

    tm = _choose_row_tile(M, tm_target)
    Mp = _round_up(M, tm)
    if Mp != M:
        cols = jnp.pad(cols, ((0, Mp - M), (0, 0)))
    grid = (Mp // tm,)

    bytes_accessed = (cols.size * cols.dtype.itemsize
                      + w_fused.size * w_fused.dtype.itemsize
                      + b2.size * b2.dtype.itemsize
                      + Mp * Cout * 4)

    out = pl.pallas_call(
        functools.partial(_fused_conv_gemm_kernel, relu=relu),
        out_shape=jax.ShapeDtypeStruct((Mp, Cout), jnp.float32),
        grid_spec=pltpu.PrefetchScalarGridSpec(
            num_scalar_prefetch=0,
            grid=grid,
            in_specs=[
                pl.BlockSpec((tm, K), lambda i: (i, 0)),     # streamed row tiles
                pl.BlockSpec((K, Cout), lambda i: (0, 0)),   # resident weight
                pl.BlockSpec((1, Cout), lambda i: (0, 0)),   # resident bias
            ],
            out_specs=pl.BlockSpec((tm, Cout), lambda i: (i, 0)),
        ),
        compiler_params=pltpu.CompilerParams(
            dimension_semantics=("parallel",)),
        cost_estimate=pl.CostEstimate(
            flops=2 * Mp * K * Cout,
            transcendentals=0,
            bytes_accessed=bytes_accessed),
    )(cols, w_fused, b2)
    return out[:M].reshape(N, D, H, W, Cout)


# --------------------------- pure-JAX reference ----------------------------- #

def conv3d_bias_relu_ref(x, w, b, *, relu=True):
    y = jax.lax.conv_general_dilated(
        x, jnp.transpose(w, (2, 3, 4, 1, 0)),
        window_strides=(1, 1, 1), padding="SAME",
        dimension_numbers=("NDHWC", "DHWIO", "NDHWC"))
    y = y + b
    return jnp.maximum(y, 0.0) if relu else y


# ------------------------- parameters (deterministic) ----------------------- #

def _fold_bn(w, gamma, beta, mean, var, eps=1e-5):
    # eval-mode BatchNorm folded into conv: y = conv(x) * scale + shift
    scale = gamma / jnp.sqrt(var + eps)
    return w * scale[:, None, None, None, None], beta - mean * scale


def _init_conv_bn(key, cin, cout):
    kw, kg, kb, km, kv = jax.random.split(key, 5)
    fan_in = cin * 27
    w = jax.random.normal(kw, (cout, cin, 3, 3, 3), jnp.float32) / math.sqrt(fan_in)
    gamma = jax.random.uniform(kg, (cout,), jnp.float32, 0.5, 1.5)
    beta = 0.1 * jax.random.normal(kb, (cout,), jnp.float32)
    mean = 0.1 * jax.random.normal(km, (cout,), jnp.float32)
    var = jax.random.uniform(kv, (cout,), jnp.float32, 0.5, 1.5)
    return _fold_bn(w, gamma, beta, mean, var)


# ------------------------------ decoder module ------------------------------ #

class EfficientUnet3DDecoderPallas:
    def __init__(self, encoder_channels, decoder_channels, n_blocks, key):
        if n_blocks != len(decoder_channels):
            raise ValueError("n_blocks must equal len(decoder_channels)")
        enc = list(encoder_channels)[1:][::-1]
        head_channels = enc[0]
        in_channels = [head_channels] + list(decoder_channels[:-1])
        skip_channels = list(enc[1:]) + [0]
        out_channels = list(decoder_channels)
        self.params = []
        for in_ch, sk_ch, out_ch in zip(in_channels, skip_channels, out_channels):
            key, k1, k2 = jax.random.split(key, 3)
            w1, b1 = _init_conv_bn(k1, in_ch + sk_ch, out_ch)
            w2, b2 = _init_conv_bn(k2, out_ch, out_ch)
            self.params.append((w1, b1, w2, b2))

    def __call__(self, *features, conv_fn=conv3d_bias_relu_pallas):
        # features are NDHWC here
        feats = features[1:][::-1]
        x = feats[0]                 # self.center = nn.Identity()
        skips = feats[1:]
        for i, (w1, b1, w2, b2) in enumerate(self.params):
            # nearest-neighbor upsample x2 along D, H, W (XLA glue)
            x = jnp.repeat(jnp.repeat(jnp.repeat(x, 2, axis=1), 2, axis=2), 2, axis=3)
            skip = skips[i] if i < len(skips) else None
            if skip is not None:
                x = jnp.concatenate([x, skip], axis=-1)
                # attention1 = Identity (attention_type=None)
            x = conv_fn(x, w1, b1, relu=True)
            x = conv_fn(x, w2, b2, relu=True)
            # attention2 = Identity; dropout=None -> Identity
        return x


# ----------------------------------- main ----------------------------------- #

if __name__ == "__main__":
    key = jax.random.PRNGKey(0)
    N = 2
    encoder_channels = (4, 8, 16, 32)     # encoder stage channels (first is dropped)
    decoder_channels = (16, 8, 8)
    n_blocks = 3
    spatial = (16, 8, 4, 2)               # cubic D=H=W per encoder stage

    k_feat, k_par = jax.random.split(key)
    fkeys = jax.random.split(k_feat, len(encoder_channels))

    # PyTorch-convention NCDHW encoder features
    feats_ncdhw = [
        jax.random.normal(fk, (N, c, s, s, s), jnp.float32)
        for fk, c, s in zip(fkeys, encoder_channels, spatial)
    ]
    # convert to the kernel layout (NDHWC)
    feats = [jnp.transpose(f, (0, 2, 3, 4, 1)) for f in feats_ncdhw]

    decoder = EfficientUnet3DDecoderPallas(
        encoder_channels, decoder_channels, n_blocks, k_par)

    # Fast path: bf16 MXU inputs, f32 accumulate + epilogue.
    out = decoder(*feats)
    out = jax.block_until_ready(out)

    # XLA f32 reference and an f32-input Pallas path for a tighter check.
    ref = decoder(*feats, conv_fn=conv3d_bias_relu_ref)
    ref = jax.block_until_ready(ref)
    out_f32 = decoder(*feats, conv_fn=functools.partial(
        conv3d_bias_relu_pallas, compute_dtype=jnp.float32))
    out_f32 = jax.block_until_ready(out_f32)

    out_ncdhw = jnp.transpose(out, (0, 4, 1, 2, 3))        # back to PyTorch NCDHW
    assert out_ncdhw.shape == (N, decoder_channels[-1], 16, 16, 16), out_ncdhw.shape

    # f32 pallas vs f32 XLA conv (tight-ish)
    np.testing.assert_allclose(np.asarray(out_f32), np.asarray(ref),
                               rtol=2e-2, atol=2e-2)
    # bf16-input pallas vs f32 XLA conv (bf16-level tolerance over 6 conv layers)
    np.testing.assert_allclose(np.asarray(out), np.asarray(ref),
                               rtol=5e-2, atol=5e-2)

    print("KERNEL_OK")
</pallas_src>

<mosaic_0001>
module attributes {stable_mosaic.version = 11 : i64} {
  func.func @_fused_conv_gemm_kernel(%arg0: i32, %arg1: memref<64x1296xbf16, #tpu.memory_space<vmem>>, %arg2: memref<1296x16xbf16, #tpu.memory_space<vmem>>, %arg3: memref<1x16xf32, #tpu.memory_space<vmem>>, %arg4: memref<64x16xf32, #tpu.memory_space<vmem>>) attributes {dimension_semantics = [#tpu.dimension_semantics<parallel>], iteration_bounds = array<i64: 2>, scalar_prefetch = 0 : i64, scratch_operands = 0 : i64, tpu.core_type = #tpu.core_type<tc>, window_params = [{transform_indices = @transform_0, window_bounds = array<i64: 64, 1296>}, {pipeline_mode = #tpu.pipeline_mode<synchronous>, transform_indices = @transform_1, window_bounds = array<i64: 1296, 16>}, {pipeline_mode = #tpu.pipeline_mode<synchronous>, transform_indices = @transform_2, window_bounds = array<i64: 1, 16>}, {transform_indices = @transform_3, window_bounds = array<i64: 64, 16>}]} {
    %c0 = arith.constant 0 : index
    %c0_0 = arith.constant 0 : index
    %0 = vector.load %arg1[%c0, %c0_0] : memref<64x1296xbf16, #tpu.memory_space<vmem>>, vector<64x1296xbf16>
    %c0_1 = arith.constant 0 : index
    %c0_2 = arith.constant 0 : index
    %1 = vector.load %arg2[%c0_1, %c0_2] : memref<1296x16xbf16, #tpu.memory_space<vmem>>, vector<1296x16xbf16>
    %cst = arith.constant dense<0.000000e+00> : vector<64x16xf32>
    %2 = tpu.matmul %0, %1, %cst {dimension_numbers = #tpu.dot_dimension_numbers<[1], [0], [0], [1], [0, 0, 1, 1], [], []>} : vector<64x1296xbf16>, vector<1296x16xbf16>, vector<64x16xf32> -> vector<64x16xf32>
    %c0_3 = arith.constant 0 : index
    %c0_4 = arith.constant 0 : index
    %3 = vector.load %arg3[%c0_3, %c0_4] : memref<1x16xf32, #tpu.memory_space<vmem>>, vector<1x16xf32>
    %4 = vector.broadcast %3 : vector<1x16xf32> to vector<64x16xf32>
    %5 = arith.addf %2, %4 : vector<64x16xf32>
    %cst_5 = arith.constant 0.000000e+00 : f32
    %6 = vector.broadcast %cst_5 : f32 to vector<64x16xf32>
    %7 = arith.maximumf %5, %6 : vector<64x16xf32>
    %c0_6 = arith.constant 0 : index
    %c0_7 = arith.constant 0 : index
    %8 = vector.load %arg4[%c0_6, %c0_7] : memref<64x16xf32, #tpu.memory_space<vmem>>, vector<64x16xf32>
    tpu.vector_store %arg4[%c0_6, %c0_7], %7 {strides = array<i32>} : memref<64x16xf32, #tpu.memory_space<vmem>>, vector<64x16xf32>,
    return
  }
  func.func @transform_0(%arg0: i32) -> (i32, i32) {
    %c0_i32 = arith.constant 0 : i32
    %c0_i32_0 = arith.constant 0 : i32
    return %arg0, %c0_i32 : i32, i32
  }
  func.func @transform_1(%arg0: i32) -> (i32, i32) {
    %c0_i32 = arith.constant 0 : i32
    %c0_i32_0 = arith.constant 0 : i32
    %c0_i32_1 = arith.constant 0 : i32
    return %c0_i32, %c0_i32_0 : i32, i32
  }
  func.func @transform_2(%arg0: i32) -> (i32, i32) {
    %c0_i32 = arith.constant 0 : i32
    %c0_i32_0 = arith.constant 0 : i32
    %c0_i32_1 = arith.constant 0 : i32
    return %c0_i32, %c0_i32_0 : i32, i32
  }
  func.func @transform_3(%arg0: i32) -> (i32, i32) {
    %c0_i32 = arith.constant 0 : i32
    %c0_i32_0 = arith.constant 0 : i32
    return %arg0, %c0_i32 : i32, i32
  }
}

</mosaic_0001>

<llo_original>
// kernel: tpu_custom_call.1
$region0: #{tpu_custom_call.1}
  #allocation0 [shape = 'u32[]', space=smem, size = 0x4, offset = 0x4, fixed_abs, tag = 'smem constant byte address 0x4 - core index']
  #allocation1 [shape = 'u32[144,128]{1,0:T(1,128)}', space=vmem, size = 0x12000, scoped, tag = 'internal scratch']
  %s0 = inlined_call_operand.vmem [shape: bf16[128,1296], index: 0, kind: input, shape index: {}]
  %s1 = inlined_call_operand.vmem [shape: bf16[1296,16], index: 1, kind: input, shape index: {}]
  %s2 = inlined_call_operand.vmem [shape: f32[1,16], index: 2, kind: input, shape index: {}]
  %s3 = inlined_call_operand.vmem [shape: f32[128,16], index: 3, kind: output, shape index: {}]
  %s4 = sld [smem:[#allocation0]]
  $region45: #{tpu_custom_call.1} parent=0
    _
  %s6 = ssub.s32 1, %s4
  %s7 = scalar_select 0, %s6, %s4
  loop: start=0, step=1, limit=4
  $region2: #{tpu_custom_call.1} parent=0 // loop_pre_header
    _
  $region3: #{tpu_custom_call.1} parent=0 // loop_header
    %s9 = sphi 0, %s13
    %p10 = scmp.ge.s32.totalorder %s9, 4
    %s19 = sphi 0, %s21
    %s22 = sphi 0, %s19
    %s23 = sphi 0, %s22
    %s39 = sphi 0, %s23
    %s43 = sphi 0, %s43
    %s45 = sphi 0, %s43
    %s46 = sphi 0, %s45
    %s60 = sphi 0, %s46
    %s64 = sphi 0, %s64
    %s66 = sphi 0, %s64
    %s67 = sphi 0, %s66
    %s81 = sphi 0, %s67
    %s87 = sphi 0, %s89
    %s90 = sphi 0, %s87
    %s91 = sphi 0, %s90
    %s107 = sphi 0, %s91
  $region4: #{tpu_custom_call.1} parent=0 // loop_header_branch
    %12 = sbr.rel (%p10) target = $region8
  $region5: #{tpu_custom_call.1} parent=0 // loop_body
    %s14 = ssub.s32 %s9, 1
    %s15 = ssub.s32 %s9, 2
    %s16 = sadd.s32 %s9, 1
    %s17 = ssub.s32 %s9, %s16
    %p18 = scmp.eq.s32.totalorder %s17, 0
    %s20 = sadd.s32 %s19, 1
    %s21 = scalar_select %p18, %s19, %s20
    %p24 = pneg %p18
    %p25 = scmp.eq.s32.totalorder %s9, 1
    %p26 = por %p24, %p25
    %p27 = scmp.ne.s32.totalorder %s19, %s22
    %p28 = scmp.eq.s32.totalorder %s9, 0
    %p29 = por %p27, %p28
    %p30 = scmp.ne.s32.totalorder %s19, %s22
    %p31 = scmp.eq.s32.totalorder %s14, 1
    %p32 = por %p30, %p31
    %p33 = scmp.ne.s32.totalorder %s22, %s23
    %p34 = scmp.eq.s32.totalorder %s14, 0
    %p35 = por %p33, %p34
    %p36 = scmp.ne.s32.totalorder %s22, %s23
    %p37 = scmp.eq.s32.totalorder %s15, 1
    %p38 = por %p36, %p37
    %p40 = scmp.ne.s32.totalorder %s23, %s39
    %p41 = scmp.eq.s32.totalorder %s15, 0
    %p42 = por %p40, %p41
    %s44 = sadd.s32 %s43, 1
    %p47 = scmp.eq.s32.totalorder %s9, 1
    %p48 = scmp.ne.s32.totalorder %s43, %s45
    %p49 = scmp.eq.s32.totalorder %s9, 0
    %p50 = por %p48, %p49
    %p51 = scmp.ne.s32.totalorder %s43, %s45
    %p52 = scmp.eq.s32.totalorder %s14, 1
    %p53 = por %p51, %p52
    %p54 = scmp.ne.s32.totalorder %s45, %s46
    %p55 = scmp.eq.s32.totalorder %s14, 0
    %p56 = por %p54, %p55
    %p57 = scmp.ne.s32.totalorder %s45, %s46
    %p58 = scmp.eq.s32.totalorder %s15, 1
    %p59 = por %p57, %p58
    %p61 = scmp.ne.s32.totalorder %s46, %s60
    %p62 = scmp.eq.s32.totalorder %s15, 0
    %p63 = por %p61, %p62
    %s65 = sadd.s32 %s64, 1
    %p68 = scmp.eq.s32.totalorder %s9, 1
    %p69 = scmp.ne.s32.totalorder %s64, %s66
    %p70 = scmp.eq.s32.totalorder %s9, 0
    %p71 = por %p69, %p70
    %p72 = scmp.ne.s32.totalorder %s64, %s66
    %p73 = scmp.eq.s32.totalorder %s14, 1
    %p74 = por %p72, %p73
    %p75 = scmp.ne.s32.totalorder %s66, %s67
    %p76 = scmp.eq.s32.totalorder %s14, 0
    %p77 = por %p75, %p76
    %p78 = scmp.ne.s32.totalorder %s66, %s67
    %p79 = scmp.eq.s32.totalorder %s15, 1
    %p80 = por %p78, %p79
    %p82 = scmp.ne.s32.totalorder %s67, %s81
    %p83 = scmp.eq.s32.totalorder %s15, 0
    %p84 = por %p82, %p83
    %s85 = ssub.s32 %s9, %s16
    %p86 = scmp.eq.s32.totalorder %s85, 0
    %s88 = sadd.s32 %s87, 1
    %s89 = scalar_select %p86, %s87, %s88
    %p92 = pneg %p86
    %p93 = scmp.eq.s32.totalorder %s9, 1
    %p94 = por %p92, %p93
    %p95 = scmp.ne.s32.totalorder %s87, %s90
    %p96 = scmp.eq.s32.totalorder %s9, 0
    %p97 = por %p95, %p96
    %p98 = scmp.ne.s32.totalorder %s87, %s90
    %p99 = scmp.eq.s32.totalorder %s14, 1
    %p100 = por %p98, %p99
    %p101 = scmp.ne.s32.totalorder %s90, %s91
    %p102 = scmp.eq.s32.totalorder %s14, 0
    %p103 = por %p101, %p102
    %p104 = scmp.ne.s32.totalorder %s90, %s91
    %p105 = scmp.eq.s32.totalorder %s15, 1
    %p106 = por %p104, %p105
    %p108 = scmp.ne.s32.totalorder %s91, %s107
    %p109 = scmp.eq.s32.totalorder %s15, 0
    %p110 = por %p108, %p109
    %p111 = scmp.le.s32.totalorder 1, %s9
    %p112 = scmp.lt.s32.totalorder %s9, 3
    %p113 = pnand %p111, %p112
    %p114 = pneg %p113
    // Predicated region
    $region9: #{tpu_custom_call.1} parent=5 // pred_check
      _
    $region10: #{tpu_custom_call.1} parent=5 // pred_check_branch
      %116 = sbr.rel (%p113) target = $region12
    $region11: #{tpu_custom_call.1} parent=5 // pred_region
      %s117 = ssub.s32 %s9, 1
      // Predicated region
      $region13: #{tpu_custom_call.1} parent=11 // pred_check
        %p118 = pneg %p56
      $region14: #{tpu_custom_call.1} parent=11 // pred_check_branch
        %120 = sbr.rel (%p118) target = $region16
      $region15: #{tpu_custom_call.1} parent=11 // pred_region
        _
      $region16: #{tpu_custom_call.1} parent=11 // pred_fallthru
        _
      // Predicated region
      $region17: #{tpu_custom_call.1} parent=11 // pred_check
        %p121 = pneg %p77
      $region18: #{tpu_custom_call.1} parent=11 // pred_check_branch
        %123 = sbr.rel (%p121) target = $region20
      $region19: #{tpu_custom_call.1} parent=11 // pred_region
        _
      $region20: #{tpu_custom_call.1} parent=11 // pred_fallthru
        _
    $region12: #{tpu_custom_call.1} parent=5 // pred_fallthru
      _
    %p124 = scmp.lt.s32.totalorder %s9, 2
    // Predicated region
    $region21: #{tpu_custom_call.1} parent=5 // pred_check
      %p125 = pneg %p124
    $region22: #{tpu_custom_call.1} parent=5 // pred_check_branch
      %127 = sbr.rel (%p125) target = $region24
    $region23: #{tpu_custom_call.1} parent=5 // pred_region
      // Predicated region
      $region25: #{tpu_custom_call.1} parent=23 // pred_check
        %p128 = pneg %p29
      $region26: #{tpu_custom_call.1} parent=23 // pred_check_branch
        %130 = sbr.rel (%p128) target = $region28
      $region27: #{tpu_custom_call.1} parent=23 // pred_region
        %s131 = smul.u32 8, %s9
        %p132 = scmp.lt.s32.totalorder %s131, 15
        %s133 = scalar_select %p132, %s131, 15
        %s134 = smul.addr %s133, 11
        %s135 = smul.addr %s134, 4
        %s136 = scalar_lea.vmem %s0, %s135
        %s137 = smul.u32 8, %s9
      $region28: #{tpu_custom_call.1} parent=23 // pred_fallthru
        _
    $region24: #{tpu_custom_call.1} parent=5 // pred_fallthru
      _
    %p138 = scmp.le.s32.totalorder 1, %s9
    %p139 = scmp.lt.s32.totalorder %s9, 3
    %p140 = pnand %p138, %p139
    %p141 = pneg %p140
    // Predicated region
    $region29: #{tpu_custom_call.1} parent=5 // pred_check
      _
    $region30: #{tpu_custom_call.1} parent=5 // pred_check_branch
      %143 = sbr.rel (%p140) target = $region32
    $region31: #{tpu_custom_call.1} parent=5 // pred_region
      %s144 = ssub.s32 %s9, 1
      %s145 = smul.u32 8, %s14
      %p146 = scmp.lt.s32.totalorder %s145, 15
      %s147 = scalar_select %p146, %s145, 15
      %s148 = smul.addr %s147, 11
      %s149 = smul.addr %s148, 4
      %s150 = scalar_lea.vmem %s0, %s149
      %p151 = pneg %p35
      %p152 = pneg %p32
      %p153 = pneg %p56
      %p154 = pneg %p53
      %p155 = pneg %p77
      %p156 = pneg %p74
      %p157 = pneg %p103
      %p158 = pneg %p100
      %s159 = smul.u32 8, %s14
      %p160 = scmp.lt.s32.totalorder %s159, 15
      %s161 = scalar_select %p160, %s159, 15
      %s162 = smul.addr %s161, 8
      %s163 = scalar_lea.vmem %s3, %s162
      %s164 = smul.u32 8, %s14
      %p165 = scmp.lt.s32.totalorder %s164, 15
      %s166 = scalar_select %p165, %s164, 15
      %s167 = smul.addr %s166, 11
      %s168 = smul.addr %s167, 4
      %s169 = scalar_lea.vmem %s0, %s168
      %s170 = smul.u32 8, %s14
      %s171 = smul.u32 8, %s14
      %p172 = scmp.lt.s32.totalorder %s171, 15
      %s173 = scalar_select %p172, %s171, 15
      %s174 = smul.addr %s173, 8
      %s175 = scalar_lea.vmem %s3, %s174
      %s176 = smul.u32 8, %s14
      %v178 = vld [vmem:[%s169] sm:$0xff]
      %v179 = vld [vmem:[%s169 + $0x8] sm:$0xff]
      %v180 = vld [vmem:[%s169 + $0x10] sm:$0xff]
      %v181 = vld [vmem:[%s169 + $0x18] sm:$0xff]
      %v182 = vld [vmem:[%s169 + $0x20] sm:$0xff]
      %v183 = vld [vmem:[%s169 + $0x28] sm:$0xf]
      %v184 = vld [vmem:[%s169 + $0x2c] sm:$0xff]
      %v185 = vld [vmem:[%s169 + $0x34] sm:$0xff]
      %v186 = vld [vmem:[%s169 + $0x3c] sm:$0xff]
      %v187 = vld [vmem:[%s169 + $0x44] sm:$0xff]
      %v188 = vld [vmem:[%s169 + $0x4c] sm:$0xff]
      %v189 = vld [vmem:[%s169 + $0x54] sm:$0xf]
      %v190 = vld [vmem:[%s169 + $0x58] sm:$0xff]
      %v191 = vld [vmem:[%s169 + $0x60] sm:$0xff]
      %v192 = vld [vmem:[%s169 + $0x68] sm:$0xff]
      %v193 = vld [vmem:[%s169 + $0x70] sm:$0xff]
      %v194 = vld [vmem:[%s169 + $0x78] sm:$0xff]
      %v195 = vld [vmem:[%s169 + $0x80] sm:$0xf]
      %v196 = vld [vmem:[%s169 + $0x84] sm:$0xff]
      %v197 = vld [vmem:[%s169 + $0x8c] sm:$0xff]
      %v198 = vld [vmem:[%s169 + $0x94] sm:$0xff]
      %v199 = vld [vmem:[%s169 + $0x9c] sm:$0xff]
      %v200 = vld [vmem:[%s169 + $0xa4] sm:$0xff]
      %v201 = vld [vmem:[%s169 + $0xac] sm:$0xf]
      %v202 = vld [vmem:[%s169 + $0xb0] sm:$0xff]
      %v203 = vld [vmem:[%s169 + $0xb8] sm:$0xff]
      %v204 = vld [vmem:[%s169 + $0xc0] sm:$0xff]
      %v205 = vld [vmem:[%s169 + $0xc8] sm:$0xff]
      %v206 = vld [vmem:[%s169 + $0xd0] sm:$0xff]
      %v207 = vld [vmem:[%s169 + $0xd8] sm:$0xf]
      %v208 = vld [vmem:[%s169 + $0xdc] sm:$0xff]
      %v209 = vld [vmem:[%s169 + $0xe4] sm:$0xff]
      %v210 = vld [vmem:[%s169 + $0xec] sm:$0xff]
      %v211 = vld [vmem:[%s169 + $0xf4] sm:$0xff]
      %v212 = vld [vmem:[%s169 + $0xfc] sm:$0xff]
      %v213 = vld [vmem:[%s169 + $0x104] sm:$0xf]
      %v214 = vld [vmem:[%s169 + $0x108] sm:$0xff]
      %v215 = vld [vmem:[%s169 + $0x110] sm:$0xff]
      %v216 = vld [vmem:[%s169 + $0x118] sm:$0xff]
      %v217 = vld [vmem:[%s169 + $0x120] sm:$0xff]
      %v218 = vld [vmem:[%s169 + $0x128] sm:$0xff]
      %v219 = vld [vmem:[%s169 + $0x130] sm:$0xf]
      %v220 = vld [vmem:[%s169 + $0x134] sm:$0xff]
      %v221 = vld [vmem:[%s169 + $0x13c] sm:$0xff]
      %v222 = vld [vmem:[%s169 + $0x144] sm:$0xff]
      %v223 = vld [vmem:[%s169 + $0x14c] sm:$0xff]
      %v224 = vld [vmem:[%s169 + $0x154] sm:$0xff]
      %v225 = vld [vmem:[%s169 + $0x15c] sm:$0xf]
      %v226 = vld [vmem:[%s1] sm:$0xf]
      %v227 = vld [vmem:[%s1 + $0x4] sm:$0xf]
      %v228 = vld [vmem:[%s1 + $0x8] sm:$0xf]
      %v229 = vld [vmem:[%s1 + $0xc] sm:$0xf]
      %v230 = vld [vmem:[%s1 + $0x10] sm:$0xf]
      %v231 = vld [vmem:[%s1 + $0x14] sm:$0xf]
      %v232 = vld [vmem:[%s1 + $0x18] sm:$0xf]
      %v233 = vld [vmem:[%s1 + $0x1c] sm:$0xf]
      %v234 = vld [vmem:[%s1 + $0x20] sm:$0xf]
      %v235 = vld [vmem:[%s1 + $0x24] sm:$0xf]
      %v236 = vld [vmem:[%s1 + $0x28] sm:$0xf]
      %v237 = vld [vmem:[%s1 + $0x2c] sm:$0xf]
      %v238 = vld [vmem:[%s1 + $0x30] sm:$0xf]
      %v239 = vld [vmem:[%s1 + $0x34] sm:$0xf]
      %v240 = vld [vmem:[%s1 + $0x38] sm:$0xf]
      %v241 = vld [vmem:[%s1 + $0x3c] sm:$0xf]
      %v242 = vld [vmem:[%s1 + $0x40] sm:$0xf]
      %v243 = vld [vmem:[%s1 + $0x44] sm:$0xf]
      %v244 = vld [vmem:[%s1 + $0x48] sm:$0xf]
      %v245 = vld [vmem:[%s1 + $0x4c] sm:$0xf]
      %v246 = vld [vmem:[%s1 + $0x50] sm:$0xf]
      %v247 = vld [vmem:[%s1 + $0x54] sm:$0xf]
      %v248 = vld [vmem:[%s1 + $0x58] sm:$0xf]
      %v249 = vld [vmem:[%s1 + $0x5c] sm:$0xf]
      %v250 = vld [vmem:[%s1 + $0x60] sm:$0xf]
      %v251 = vld [vmem:[%s1 + $0x64] sm:$0xf]
      %v252 = vld [vmem:[%s1 + $0x68] sm:$0xf]
      %v253 = vld [vmem:[%s1 + $0x6c] sm:$0xf]
      %v254 = vld [vmem:[%s1 + $0x70] sm:$0xf]
      %v255 = vld [vmem:[%s1 + $0x74] sm:$0xf]
      %v256 = vld [vmem:[%s1 + $0x78] sm:$0xf]
      %v257 = vld [vmem:[%s1 + $0x7c] sm:$0xf]
      %v258 = vld [vmem:[%s1 + $0x80] sm:$0xf]
      %v259 = vld [vmem:[%s1 + $0x84] sm:$0xf]
      %v260 = vld [vmem:[%s1 + $0x88] sm:$0xf]
      %v261 = vld [vmem:[%s1 + $0x8c] sm:$0xf]
      %v262 = vld [vmem:[%s1 + $0x90] sm:$0xf]
      %v263 = vld [vmem:[%s1 + $0x94] sm:$0xf]
      %v264 = vld [vmem:[%s1 + $0x98] sm:$0xf]
      %v265 = vld [vmem:[%s1 + $0x9c] sm:$0xf]
      %v266 = vld [vmem:[%s1 + $0xa0] sm:$0xf]
      %v267 = vld [vmem:[%s1 + $0xa4] sm:$0xf]
      %v268 = vld [vmem:[%s1 + $0xa8] sm:$0xf]
      %v269 = vld [vmem:[%s1 + $0xac] sm:$0xf]
      %v270 = vld [vmem:[%s1 + $0xb0] sm:$0xf]
      %v271 = vld [vmem:[%s1 + $0xb4] sm:$0xf]
      %v272 = vld [vmem:[%s1 + $0xb8] sm:$0xf]
      %v273 = vld [vmem:[%s1 + $0xbc] sm:$0xf]
      %v274 = vld [vmem:[%s1 + $0xc0] sm:$0xf]
      %v275 = vld [vmem:[%s1 + $0xc4] sm:$0xf]
      %v276 = vld [vmem:[%s1 + $0xc8] sm:$0xf]
      %v277 = vld [vmem:[%s1 + $0xcc] sm:$0xf]
      %v278 = vld [vmem:[%s1 + $0xd0] sm:$0xf]
      %v279 = vld [vmem:[%s1 + $0xd4] sm:$0xf]
      %v280 = vld [vmem:[%s1 + $0xd8] sm:$0xf]
      %v281 = vld [vmem:[%s1 + $0xdc] sm:$0xf]
      %v282 = vld [vmem:[%s1 + $0xe0] sm:$0xf]
      %v283 = vld [vmem:[%s1 + $0xe4] sm:$0xf]
      %v284 = vld [vmem:[%s1 + $0xe8] sm:$0xf]
      %v285 = vld [vmem:[%s1 + $0xec] sm:$0xf]
      %v286 = vld [vmem:[%s1 + $0xf0] sm:$0xf]
      %v287 = vld [vmem:[%s1 + $0xf4] sm:$0xf]
      %v288 = vld [vmem:[%s1 + $0xf8] sm:$0xf]
      %v289 = vld [vmem:[%s1 + $0xfc] sm:$0xf]
      %v290 = vld [vmem:[%s1 + $0x100] sm:$0xf]
      %v291 = vld [vmem:[%s1 + $0x104] sm:$0xf]
      %v292 = vld [vmem:[%s1 + $0x108] sm:$0xf]
      %v293 = vld [vmem:[%s1 + $0x10c] sm:$0xf]
      %v294 = vld [vmem:[%s1 + $0x110] sm:$0xf]
      %v295 = vld [vmem:[%s1 + $0x114] sm:$0xf]
      %v296 = vld [vmem:[%s1 + $0x118] sm:$0xf]
      %v297 = vld [vmem:[%s1 + $0x11c] sm:$0xf]
      %v298 = vld [vmem:[%s1 + $0x120] sm:$0xf]
      %v299 = vld [vmem:[%s1 + $0x124] sm:$0xf]
      %v300 = vld [vmem:[%s1 + $0x128] sm:$0xf]
      %v301 = vld [vmem:[%s1 + $0x12c] sm:$0xf]
      %v302 = vld [vmem:[%s1 + $0x130] sm:$0xf]
      %v303 = vld [vmem:[%s1 + $0x134] sm:$0xf]
      %v304 = vld [vmem:[%s1 + $0x138] sm:$0xf]
      %v305 = vld [vmem:[%s1 + $0x13c] sm:$0xf]
      %v306 = vld [vmem:[%s1 + $0x140] sm:$0xf]
      %v307 = vld [vmem:[%s1 + $0x144] sm:$0xf]
      %v308 = vld [vmem:[%s1 + $0x148] sm:$0xf]
      %v309 = vld [vmem:[%s1 + $0x14c] sm:$0xf]
      %v310 = vld [vmem:[%s1 + $0x150] sm:$0xf]
      %v311 = vld [vmem:[%s1 + $0x154] sm:$0xf]
      %v312 = vld [vmem:[%s1 + $0x158] sm:$0xf]
      %v313 = vld [vmem:[%s1 + $0x15c] sm:$0xf]
      %v314 = vld [vmem:[%s1 + $0x160] sm:$0xf]
      %v315 = vld [vmem:[%s1 + $0x164] sm:$0xf]
      %v316 = vld [vmem:[%s1 + $0x168] sm:$0xf]
      %v317 = vld [vmem:[%s1 + $0x16c] sm:$0xf]
      %v318 = vld [vmem:[%s1 + $0x170] sm:$0xf]
      %v319 = vld [vmem:[%s1 + $0x174] sm:$0xf]
      %v320 = vld [vmem:[%s1 + $0x178] sm:$0xf]
      %v321 = vld [vmem:[%s1 + $0x17c] sm:$0xf]
      %v322 = vld [vmem:[%s1 + $0x180] sm:$0xf]
      %v323 = vld [vmem:[%s1 + $0x184] sm:$0xf]
      %v324 = vld [vmem:[%s1 + $0x188] sm:$0xf]
      %v325 = vld [vmem:[%s1 + $0x18c] sm:$0xf]
      %v326 = vld [vmem:[%s1 + $0x190] sm:$0xf]
      %v327 = vld [vmem:[%s1 + $0x194] sm:$0xf]
      %v328 = vld [vmem:[%s1 + $0x198] sm:$0xf]
      %v329 = vld [vmem:[%s1 + $0x19c] sm:$0xf]
      %v330 = vld [vmem:[%s1 + $0x1a0] sm:$0xf]
      %v331 = vld [vmem:[%s1 + $0x1a4] sm:$0xf]
      %v332 = vld [vmem:[%s1 + $0x1a8] sm:$0xf]
      %v333 = vld [vmem:[%s1 + $0x1ac] sm:$0xf]
      %v334 = vld [vmem:[%s1 + $0x1b0] sm:$0xf]
      %v335 = vld [vmem:[%s1 + $0x1b4] sm:$0xf]
      %v336 = vld [vmem:[%s1 + $0x1b8] sm:$0xf]
      %v337 = vld [vmem:[%s1 + $0x1bc] sm:$0xf]
      %v338 = vld [vmem:[%s1 + $0x1c0] sm:$0xf]
      %v339 = vld [vmem:[%s1 + $0x1c4] sm:$0xf]
      %v340 = vld [vmem:[%s1 + $0x1c8] sm:$0xf]
      %v341 = vld [vmem:[%s1 + $0x1cc] sm:$0xf]
      %v342 = vld [vmem:[%s1 + $0x1d0] sm:$0xf]
      %v343 = vld [vmem:[%s1 + $0x1d4] sm:$0xf]
      %v344 = vld [vmem:[%s1 + $0x1d8] sm:$0xf]
      %v345 = vld [vmem:[%s1 + $0x1dc] sm:$0xf]
      %v346 = vld [vmem:[%s1 + $0x1e0] sm:$0xf]
      %v347 = vld [vmem:[%s1 + $0x1e4] sm:$0xf]
      %v348 = vld [vmem:[%s1 + $0x1e8] sm:$0xf]
      %v349 = vld [vmem:[%s1 + $0x1ec] sm:$0xf]
      %v350 = vld [vmem:[%s1 + $0x1f0] sm:$0xf]
      %v351 = vld [vmem:[%s1 + $0x1f4] sm:$0xf]
      %v352 = vld [vmem:[%s1 + $0x1f8] sm:$0xf]
      %v353 = vld [vmem:[%s1 + $0x1fc] sm:$0xf]
      %v354 = vld [vmem:[%s1 + $0x200] sm:$0xf]
      %v355 = vld [vmem:[%s1 + $0x204] sm:$0xf]
      %v356 = vld [vmem:[%s1 + $0x208] sm:$0xf]
      %v357 = vld [vmem:[%s1 + $0x20c] sm:$0xf]
      %v358 = vld [vmem:[%s1 + $0x210] sm:$0xf]
      %v359 = vld [vmem:[%s1 + $0x214] sm:$0xf]
      %v360 = vld [vmem:[%s1 + $0x218] sm:$0xf]
      %v361 = vld [vmem:[%s1 + $0x21c] sm:$0xf]
      %v362 = vld [vmem:[%s1 + $0x220] sm:$0xf]
      %v363 = vld [vmem:[%s1 + $0x224] sm:$0xf]
      %v364 = vld [vmem:[%s1 + $0x228] sm:$0xf]
      %v365 = vld [vmem:[%s1 + $0x22c] sm:$0xf]
      %v366 = vld [vmem:[%s1 + $0x230] sm:$0xf]
      %v367 = vld [vmem:[%s1 + $0x234] sm:$0xf]
      %v368 = vld [vmem:[%s1 + $0x238] sm:$0xf]
      %v369 = vld [vmem:[%s1 + $0x23c] sm:$0xf]
      %v370 = vld [vmem:[%s1 + $0x240] sm:$0xf]
      %v371 = vld [vmem:[%s1 + $0x244] sm:$0xf]
      %v372 = vld [vmem:[%s1 + $0x248] sm:$0xf]
      %v373 = vld [vmem:[%s1 + $0x24c] sm:$0xf]
      %v374 = vld [vmem:[%s1 + $0x250] sm:$0xf]
      %v375 = vld [vmem:[%s1 + $0x254] sm:$0xf]
      %v376 = vld [vmem:[%s1 + $0x258] sm:$0xf]
      %v377 = vld [vmem:[%s1 + $0x25c] sm:$0xf]
      %v378 = vld [vmem:[%s1 + $0x260] sm:$0xf]
      %v379 = vld [vmem:[%s1 + $0x264] sm:$0xf]
      %v380 = vld [vmem:[%s1 + $0x268] sm:$0xf]
      %v381 = vld [vmem:[%s1 + $0x26c] sm:$0xf]
      %v382 = vld [vmem:[%s1 + $0x270] sm:$0xf]
      %v383 = vld [vmem:[%s1 + $0x274] sm:$0xf]
      %v384 = vld [vmem:[%s1 + $0x278] sm:$0xf]
      %v385 = vld [vmem:[%s1 + $0x27c] sm:$0xf]
      %v386 = vld [vmem:[%s1 + $0x280] sm:$0xf]
      %v387 = vld [vmem:[%s1 + $0x284] sm:$0xf]
      %v388 = vld [vmem:[%s2] sm:$0x1]
      %v390 = vlaneseq
      %v391 = vshrl.u32 %v390, 7
      %v392 = vsub.s32 0, %v391
      %v393 = vrot.slane %v388, %v392
      %v443 = vunpack.c.l.b16 %v178
      %v444 = vunpack.c.h.b16 %v178
      %v445 = vunpack.c.l.b16 %v179
      %v446 = vunpack.c.h.b16 %v179
      %v447 = vunpack.c.l.b16 %v180
      %v448 = vunpack.c.h.b16 %v180
      %v449 = vunpack.c.l.b16 %v181
      %v450 = vunpack.c.h.b16 %v181
      %v451 = vunpack.c.l.b16 %v182
      %v452 = vunpack.c.h.b16 %v182
      %v453 = vunpack.c.l.b16 %v183
      %v454 = vunpack.c.l.b16 %v184
      %v455 = vunpack.c.h.b16 %v184
      %v456 = vunpack.c.l.b16 %v185
      %v457 = vunpack.c.h.b16 %v185
      %v458 = vunpack.c.l.b16 %v186
      %v459 = vunpack.c.h.b16 %v186
      %v460 = vunpack.c.l.b16 %v187
      %v461 = vunpack.c.h.b16 %v187
      %v462 = vunpack.c.l.b16 %v188
      %v463 = vunpack.c.h.b16 %v188
      %v464 = vunpack.c.l.b16 %v189
      %v465 = vunpack.c.l.b16 %v190
      %v466 = vunpack.c.h.b16 %v190
      %v467 = vunpack.c.l.b16 %v191
      %v468 = vunpack.c.h.b16 %v191
      %v469 = vunpack.c.l.b16 %v192
      %v470 = vunpack.c.h.b16 %v192
      %v471 = vunpack.c.l.b16 %v193
      %v472 = vunpack.c.h.b16 %v193
      %v473 = vunpack.c.l.b16 %v194
      %v474 = vunpack.c.h.b16 %v194
      %v475 = vunpack.c.l.b16 %v195
      %v476 = vunpack.c.l.b16 %v196
      %v477 = vunpack.c.h.b16 %v196
      %v478 = vunpack.c.l.b16 %v197
      %v479 = vunpack.c.h.b16 %v197
      %v480 = vunpack.c.l.b16 %v198
      %v481 = vunpack.c.h.b16 %v198
      %v482 = vunpack.c.l.b16 %v199
      %v483 = vunpack.c.h.b16 %v199
      %v484 = vunpack.c.l.b16 %v200
      %v485 = vunpack.c.h.b16 %v200
      %v486 = vunpack.c.l.b16 %v201
      %v487 = vunpack.c.l.b16 %v202
      %v488 = vunpack.c.h.b16 %v202
      %v489 = vunpack.c.l.b16 %v203
      %v490 = vunpack.c.h.b16 %v203
      %v491 = vunpack.c.l.b16 %v204
      %v492 = vunpack.c.h.b16 %v204
      %v493 = vunpack.c.l.b16 %v205
      %v494 = vunpack.c.h.b16 %v205
      %v495 = vunpack.c.l.b16 %v206
      %v496 = vunpack.c.h.b16 %v206
      %v497 = vunpack.c.l.b16 %v207
      %v498 = vunpack.c.l.b16 %v208
      %v499 = vunpack.c.h.b16 %v208
      %v500 = vunpack.c.l.b16 %v209
      %v501 = vunpack.c.h.b16 %v209
      %v502 = vunpack.c.l.b16 %v210
      %v503 = vunpack.c.h.b16 %v210
      %v504 = vunpack.c.l.b16 %v211
      %v505 = vunpack.c.h.b16 %v211
      %v506 = vunpack.c.l.b16 %v212
      %v507 = vunpack.c.h.b16 %v212
      %v508 = vunpack.c.l.b16 %v213
      %v509 = vunpack.c.l.b16 %v214
      %v510 = vunpack.c.h.b16 %v214
      %v511 = vunpack.c.l.b16 %v215
      %v512 = vunpack.c.h.b16 %v215
      %v513 = vunpack.c.l.b16 %v216
      %v514 = vunpack.c.h.b16 %v216
      %v515 = vunpack.c.l.b16 %v217
      %v516 = vunpack.c.h.b16 %v217
      %v517 = vunpack.c.l.b16 %v218
      %v518 = vunpack.c.h.b16 %v218
      %v519 = vunpack.c.l.b16 %v219
      %v520 = vunpack.c.l.b16 %v220
      %v521 = vunpack.c.h.b16 %v220
      %v522 = vunpack.c.l.b16 %v221
      %v523 = vunpack.c.h.b16 %v221
      %v524 = vunpack.c.l.b16 %v222
      %v525 = vunpack.c.h.b16 %v222
      %v526 = vunpack.c.l.b16 %v223
      %v527 = vunpack.c.h.b16 %v223
      %v528 = vunpack.c.l.b16 %v224
      %v529 = vunpack.c.h.b16 %v224
      %v530 = vunpack.c.l.b16 %v225
      %v531 = vpack.c.b16 %v454, %v443
      %v532 = vpack.c.b16 %v455, %v444
      %v533 = vpack.c.b16 %v456, %v445
      %v534 = vpack.c.b16 %v457, %v446
      %v535 = vpack.c.b16 %v458, %v447
      %v536 = vpack.c.b16 %v459, %v448
      %v537 = vpack.c.b16 %v460, %v449
      %v538 = vpack.c.b16 %v461, %v450
      %v539 = vpack.c.b16 %v462, %v451
      %v540 = vpack.c.b16 %v463, %v452
      %v541 = vpack.c.b16 %v464, %v453
      %v542 = vpack.c.b16 %v476, %v465
      %v543 = vpack.c.b16 %v477, %v466
      %v544 = vpack.c.b16 %v478, %v467
      %v545 = vpack.c.b16 %v479, %v468
      %v546 = vpack.c.b16 %v480, %v469
      %v547 = vpack.c.b16 %v481, %v470
      %v548 = vpack.c.b16 %v482, %v471
      %v549 = vpack.c.b16 %v483, %v472
      %v550 = vpack.c.b16 %v484, %v473
      %v551 = vpack.c.b16 %v485, %v474
      %v552 = vpack.c.b16 %v486, %v475
      %v553 = vpack.c.b16 %v498, %v487
      %v554 = vpack.c.b16 %v499, %v488
      %v555 = vpack.c.b16 %v500, %v489
      %v556 = vpack.c.b16 %v501, %v490
      %v557 = vpack.c.b16 %v502, %v491
      %v558 = vpack.c.b16 %v503, %v492
      %v559 = vpack.c.b16 %v504, %v493
      %v560 = vpack.c.b16 %v505, %v494
      %v561 = vpack.c.b16 %v506, %v495
      %v562 = vpack.c.b16 %v507, %v496
      %v563 = vpack.c.b16 %v508, %v497
      %v564 = vpack.c.b16 %v520, %v509
      %v565 = vpack.c.b16 %v521, %v510
      %v566 = vpack.c.b16 %v522, %v511
      %v567 = vpack.c.b16 %v523, %v512
      %v568 = vpack.c.b16 %v524, %v513
      %v569 = vpack.c.b16 %v525, %v514
      %v570 = vpack.c.b16 %v526, %v515
      %v571 = vpack.c.b16 %v527, %v516
      %v572 = vpack.c.b16 %v528, %v517
      %v573 = vpack.c.b16 %v529, %v518
      %v574 = vpack.c.b16 %v530, %v519
      %v777 = vunpack.c.l.b16 %v226
      %v778 = vunpack.c.l.b16 %v227
      %v779 = vunpack.c.l.b16 %v228
      %v780 = vunpack.c.l.b16 %v229
      %v781 = vunpack.c.l.b16 %v230
      %v782 = vunpack.c.l.b16 %v231
      %v783 = vunpack.c.l.b16 %v232
      %v784 = vunpack.c.l.b16 %v233
      %v785 = vunpack.c.l.b16 %v234
      %v786 = vunpack.c.l.b16 %v235
      %v787 = vunpack.c.l.b16 %v236
      %v788 = vunpack.c.l.b16 %v237
      %v789 = vunpack.c.l.b16 %v238
      %v790 = vunpack.c.l.b16 %v239
      %v791 = vunpack.c.l.b16 %v240
      %v792 = vunpack.c.l.b16 %v241
      %v793 = vunpack.c.l.b16 %v242
      %v794 = vunpack.c.l.b16 %v243
      %v795 = vunpack.c.l.b16 %v244
      %v796 = vunpack.c.l.b16 %v245
      %v797 = vunpack.c.l.b16 %v246
      %v798 = vunpack.c.l.b16 %v247
      %v799 = vunpack.c.l.b16 %v248
      %v800 = vunpack.c.l.b16 %v249
      %v801 = vunpack.c.l.b16 %v250
      %v802 = vunpack.c.l.b16 %v251
      %v803 = vunpack.c.l.b16 %v252
      %v804 = vunpack.c.l.b16 %v253
      %v805 = vunpack.c.l.b16 %v254
      %v806 = vunpack.c.l.b16 %v255
      %v807 = vunpack.c.l.b16 %v256
      %v808 = vunpack.c.l.b16 %v257
      %v809 = vunpack.c.l.b16 %v258
      %v810 = vunpack.c.l.b16 %v259
      %v811 = vunpack.c.l.b16 %v260
      %v812 = vunpack.c.l.b16 %v261
      %v813 = vunpack.c.l.b16 %v262
      %v814 = vunpack.c.l.b16 %v263
      %v815 = vunpack.c.l.b16 %v264
      %v816 = vunpack.c.l.b16 %v265
      %v817 = vunpack.c.l.b16 %v266
      %v818 = vunpack.c.l.b16 %v267
      %v819 = vunpack.c.l.b16 %v268
      %v820 = vunpack.c.l.b16 %v269
      %v821 = vunpack.c.l.b16 %v270
      %v822 = vunpack.c.l.b16 %v271
      %v823 = vunpack.c.l.b16 %v272
      %v824 = vunpack.c.l.b16 %v273
      %v825 = vunpack.c.l.b16 %v274
      %v826 = vunpack.c.l.b16 %v275
      %v827 = vunpack.c.l.b16 %v276
      %v828 = vunpack.c.l.b16 %v277
      %v829 = vunpack.c.l.b16 %v278
      %v830 = vunpack.c.l.b16 %v279
      %v831 = vunpack.c.l.b16 %v280
      %v832 = vunpack.c.l.b16 %v281
      %v833 = vunpack.c.l.b16 %v282
      %v834 = vunpack.c.l.b16 %v283
      %v835 = vunpack.c.l.b16 %v284
      %v836 = vunpack.c.l.b16 %v285
      %v837 = vunpack.c.l.b16 %v286
      %v838 = vunpack.c.l.b16 %v287
      %v839 = vunpack.c.l.b16 %v288
      %v840 = vunpack.c.l.b16 %v289
      %v841 = vunpack.c.l.b16 %v290
      %v842 = vunpack.c.l.b16 %v291
      %v843 = vunpack.c.l.b16 %v292
      %v844 = vunpack.c.l.b16 %v293
      %v845 = vunpack.c.l.b16 %v294
      %v846 = vunpack.c.l.b16 %v295
      %v847 = vunpack.c.l.b16 %v296
      %v848 = vunpack.c.l.b16 %v297
      %v849 = vunpack.c.l.b16 %v298
      %v850 = vunpack.c.l.b16 %v299
      %v851 = vunpack.c.l.b16 %v300
      %v852 = vunpack.c.l.b16 %v301
      %v853 = vunpack.c.l.b16 %v302
      %v854 = vunpack.c.l.b16 %v303
      %v855 = vunpack.c.l.b16 %v304
      %v856 = vunpack.c.l.b16 %v305
      %v857 = vunpack.c.l.b16 %v306
      %v858 = vunpack.c.l.b16 %v307
      %v859 = vunpack.c.l.b16 %v308
      %v860 = vunpack.c.l.b16 %v309
      %v861 = vunpack.c.l.b16 %v310
      %v862 = vunpack.c.l.b16 %v311
      %v863 = vunpack.c.l.b16 %v312
      %v864 = vunpack.c.l.b16 %v313
      %v865 = vunpack.c.l.b16 %v314
      %v866 = vunpack.c.l.b16 %v315
      %v867 = vunpack.c.l.b16 %v316
      %v868 = vunpack.c.l.b16 %v317
      %v869 = vunpack.c.l.b16 %v318
      %v870 = vunpack.c.l.b16 %v319
      %v871 = vunpack.c.l.b16 %v320
      %v872 = vunpack.c.l.b16 %v321
      %v873 = vunpack.c.l.b16 %v322
      %v874 = vunpack.c.l.b16 %v323
      %v875 = vunpack.c.l.b16 %v324
      %v876 = vunpack.c.l.b16 %v325
      %v877 = vunpack.c.l.b16 %v326
      %v878 = vunpack.c.l.b16 %v327
      %v879 = vunpack.c.l.b16 %v328
      %v880 = vunpack.c.l.b16 %v329
      %v881 = vunpack.c.l.b16 %v330
      %v882 = vunpack.c.l.b16 %v331
      %v883 = vunpack.c.l.b16 %v332
      %v884 = vunpack.c.l.b16 %v333
      %v885 = vunpack.c.l.b16 %v334
      %v886 = vunpack.c.l.b16 %v335
      %v887 = vunpack.c.l.b16 %v336
      %v888 = vunpack.c.l.b16 %v337
      %v889 = vunpack.c.l.b16 %v338
      %v890 = vunpack.c.l.b16 %v339
      %v891 = vunpack.c.l.b16 %v340
      %v892 = vunpack.c.l.b16 %v341
      %v893 = vunpack.c.l.b16 %v342
      %v894 = vunpack.c.l.b16 %v343
      %v895 = vunpack.c.l.b16 %v344
      %v896 = vunpack.c.l.b16 %v345
      %v897 = vunpack.c.l.b16 %v346
      %v898 = vunpack.c.l.b16 %v347
      %v899 = vunpack.c.l.b16 %v348
      %v900 = vunpack.c.l.b16 %v349
      %v901 = vunpack.c.l.b16 %v350
      %v902 = vunpack.c.l.b16 %v351
      %v903 = vunpack.c.l.b16 %v352
      %v904 = vunpack.c.l.b16 %v353
      %v905 = vunpack.c.l.b16 %v354
      %v906 = vunpack.c.l.b16 %v355
      %v907 = vunpack.c.l.b16 %v356
      %v908 = vunpack.c.l.b16 %v357
      %v909 = vunpack.c.l.b16 %v358
      %v910 = vunpack.c.l.b16 %v359
      %v911 = vunpack.c.l.b16 %v360
      %v912 = vunpack.c.l.b16 %v361
      %v913 = vunpack.c.l.b16 %v362
      %v914 = vunpack.c.l.b16 %v363
      %v915 = vunpack.c.l.b16 %v364
      %v916 = vunpack.c.l.b16 %v365
      %v917 = vunpack.c.l.b16 %v366
      %v918 = vunpack.c.l.b16 %v367
      %v919 = vunpack.c.l.b16 %v368
      %v920 = vunpack.c.l.b16 %v369
      %v921 = vunpack.c.l.b16 %v370
      %v922 = vunpack.c.l.b16 %v371
      %v923 = vunpack.c.l.b16 %v372
      %v924 = vunpack.c.l.b16 %v373
      %v925 = vunpack.c.l.b16 %v374
      %v926 = vunpack.c.l.b16 %v375
      %v927 = vunpack.c.l.b16 %v376
      %v928 = vunpack.c.l.b16 %v377
      %v929 = vunpack.c.l.b16 %v378
      %v930 = vunpack.c.l.b16 %v379
      %v931 = vunpack.c.l.b16 %v380
      %v932 = vunpack.c.l.b16 %v381
      %v933 = vunpack.c.l.b16 %v382
      %v934 = vunpack.c.l.b16 %v383
      %v935 = vunpack.c.l.b16 %v384
      %v936 = vunpack.c.l.b16 %v385
      %v937 = vunpack.c.l.b16 %v386
      %v938 = vunpack.c.l.b16 %v387
      %v939 = vpack.c.b16 %v778, %v777
      %v940 = vpack.c.b16 %v780, %v779
      %v941 = vpack.c.b16 %v782, %v781
      %v942 = vpack.c.b16 %v784, %v783
      %v943 = vpack.c.b16 %v786, %v785
      %v944 = vpack.c.b16 %v788, %v787
      %v945 = vpack.c.b16 %v790, %v789
      %v946 = vpack.c.b16 %v792, %v791
      %v947 = vpack.c.b16 %v794, %v793
      %v948 = vpack.c.b16 %v796, %v795
      %v949 = vpack.c.b16 %v798, %v797
      %v950 = vpack.c.b16 %v800, %v799
      %v951 = vpack.c.b16 %v802, %v801
      %v952 = vpack.c.b16 %v804, %v803
      %v953 = vpack.c.b16 %v806, %v805
      %v954 = vpack.c.b16 %v808, %v807
      %v955 = vpack.c.b16 %v810, %v809
      %v956 = vpack.c.b16 %v812, %v811
      %v957 = vpack.c.b16 %v814, %v813
      %v958 = vpack.c.b16 %v816, %v815
      %v959 = vpack.c.b16 %v818, %v817
      %v960 = vpack.c.b16 %v820, %v819
      %v961 = vpack.c.b16 %v822, %v821
      %v962 = vpack.c.b16 %v824, %v823
      %v963 = vpack.c.b16 %v826, %v825
      %v964 = vpack.c.b16 %v828, %v827
      %v965 = vpack.c.b16 %v830, %v829
      %v966 = vpack.c.b16 %v832, %v831
      %v967 = vpack.c.b16 %v834, %v833
      %v968 = vpack.c.b16 %v836, %v835
      %v969 = vpack.c.b16 %v838, %v837
      %v970 = vpack.c.b16 %v840, %v839
      %v971 = vpack.c.b16 %v842, %v841
      %v972 = vpack.c.b16 %v844, %v843
      %v973 = vpack.c.b16 %v846, %v845
      %v974 = vpack.c.b16 %v848, %v847
      %v975 = vpack.c.b16 %v850, %v849
      %v976 = vpack.c.b16 %v852, %v851
      %v977 = vpack.c.b16 %v854, %v853
      %v978 = vpack.c.b16 %v856, %v855
      %v979 = vpack.c.b16 %v858, %v857
      %v980 = vpack.c.b16 %v860, %v859
      %v981 = vpack.c.b16 %v862, %v861
      %v982 = vpack.c.b16 %v864, %v863
      %v983 = vpack.c.b16 %v866, %v865
      %v984 = vpack.c.b16 %v868, %v867
      %v985 = vpack.c.b16 %v870, %v869
      %v986 = vpack.c.b16 %v872, %v871
      %v987 = vpack.c.b16 %v874, %v873
      %v988 = vpack.c.b16 %v876, %v875
      %v989 = vpack.c.b16 %v878, %v877
      %v990 = vpack.c.b16 %v880, %v879
      %v991 = vpack.c.b16 %v882, %v881
      %v992 = vpack.c.b16 %v884, %v883
      %v993 = vpack.c.b16 %v886, %v885
      %v994 = vpack.c.b16 %v888, %v887
      %v995 = vpack.c.b16 %v890, %v889
      %v996 = vpack.c.b16 %v892, %v891
      %v997 = vpack.c.b16 %v894, %v893
      %v998 = vpack.c.b16 %v896, %v895
      %v999 = vpack.c.b16 %v898, %v897
      %v1000 = vpack.c.b16 %v900, %v899
      %v1001 = vpack.c.b16 %v902, %v901
      %v1002 = vpack.c.b16 %v904, %v903
      %v1003 = vpack.c.b16 %v906, %v905
      %v1004 = vpack.c.b16 %v908, %v907
      %v1005 = vpack.c.b16 %v910, %v909
      %v1006 = vpack.c.b16 %v912, %v911
      %v1007 = vpack.c.b16 %v914, %v913
      %v1008 = vpack.c.b16 %v916, %v915
      %v1009 = vpack.c.b16 %v918, %v917
      %v1010 = vpack.c.b16 %v920, %v919
      %v1011 = vpack.c.b16 %v922, %v921
      %v1012 = vpack.c.b16 %v924, %v923
      %v1013 = vpack.c.b16 %v926, %v925
      %v1014 = vpack.c.b16 %v928, %v927
      %v1015 = vpack.c.b16 %v930, %v929
      %v1016 = vpack.c.b16 %v932, %v931
      %v1017 = vpack.c.b16 %v934, %v933
      %v1018 = vpack.c.b16 %v936, %v935
      %v1019 = vpack.c.b16 %v938, %v937
      %vm1101 = vcmask 130048
      %v1103 = vsel %vm1101, %v541, 0
      %v1106 = vsel %vm1101, %v552, 0
      %v1109 = vsel %vm1101, %v563, 0
      %v1112 = vsel %vm1101, %v574, 0
      %1114 = vmatprep.subr.bf16.mxu0 0
      %1115 = vmatpush1.bf16.msra.mxu0 %v939
      %1116 = vmatprep.subr.bf16.mxu0 0
      %1117 = vmatpush1.bf16.msra.mxu0 %v940
      %1118 = vmatprep.subr.bf16.mxu0 0
      %1119 = vmatpush1.bf16.msra.mxu0 %v941
      %1120 = vmatprep.subr.bf16.mxu0 0
      %1121 = vmatpush1.bf16.msra.mxu0 %v942
      %1122 = vmatprep.subr.bf16.mxu0 0
      %1123 = vmatpush1.bf16.msra.mxu0 %v943
      %1124 = vmatprep.subr.bf16.mxu0 0
      %1125 = vmatpush1.bf16.msra.mxu0 %v944
      %1126 = vmatprep.subr.bf16.mxu0 0
      %1127 = vmatpush1.bf16.msra.mxu0 %v945
      %1128 = vmatprep.subr.bf16.mxu0 0
      %1129 = vmatpush1.bf16.msra.mxu0 %v946
      %1130 = vmatprep.subr.bf16.mxu0 0
      %1131 = vmatpush1.bf16.msra.mxu0 %v947
      %1132 = vmatprep.subr.bf16.mxu0 0
      %1133 = vmatpush1.bf16.msra.mxu0 %v948
      %1134 = vmatprep.subr.bf16.mxu0 0
      %1135 = vmatpush1.bf16.msra.mxu0 %v949
      %1136 = vmatprep.subr.bf16.mxu0 0
      %1137 = vmatpush1.bf16.msra.mxu0 %v950
      %1138 = vmatprep.subr.bf16.mxu0 0
      %1139 = vmatpush1.bf16.msra.mxu0 %v951
      %1140 = vmatprep.subr.bf16.mxu0 0
      %1141 = vmatpush1.bf16.msra.mxu0 %v952
      %1142 = vmatprep.subr.bf16.mxu0 0
      %1143 = vmatpush1.bf16.msra.mxu0 %v953
      %1144 = vmatprep.subr.bf16.mxu0 0
      %1145 = vmatpush1.bf16.msra.mxu0 %v954
      %1146 = vmatprep.mubr.bf16.mxu0 %v532
      %1147 = vmatmul.mubr.bf16.gmra.mrb[0].mxu0 %v531
      %v1148 = vpop.f32.mrb[0].mxu0
      %v1149 = vadd.f32 %v393, %v1148
      %v1150 = vpop.f32.mrb[0].mxu0
      %v1151 = vpop.f32.mrb[0].mxu0
      %v1152 = vadd.f32 %v393, %v1151
      %v1153 = vpop.f32.mrb[0].mxu0
      %1154 = vmatprep.mubr.bf16.mxu0 %v543
      %1155 = vmatmul.mubr.bf16.gmra.mrb[0].mxu0 %v542
      %v1156 = vpop.f32.mrb[0].mxu0
      %v1157 = vadd.f32 %v393, %v1156
      %v1158 = vpop.f32.mrb[0].mxu0
      %v1159 = vpop.f32.mrb[0].mxu0
      %v1160 = vadd.f32 %v393, %v1159
      %v1161 = vpop.f32.mrb[0].mxu0
      %1162 = vmatprep.mubr.bf16.mxu0 %v554
      %1163 = vmatmul.mubr.bf16.gmra.mrb[0].mxu0 %v553
      %v1164 = vpop.f32.mrb[0].mxu0
      %v1165 = vadd.f32 %v393, %v1164
      %v1166 = vpop.f32.mrb[0].mxu0
      %v1167 = vpop.f32.mrb[0].mxu0
      %v1168 = vadd.f32 %v393, %v1167
      %v1169 = vpop.f32.mrb[0].mxu0
      %1170 = vmatprep.mubr.bf16.mxu0 %v565
      %1171 = vmatmul.mubr.bf16.gmra.mrb[0].mxu0 %v564
      %v1172 = vpop.f32.mrb[0].mxu0
      %v1173 = vadd.f32 %v393, %v1172
      %v1174 = vpop.f32.mrb[0].mxu0
      %v1175 = vpop.f32.mrb[0].mxu0
      %v1176 = vadd.f32 %v393, %v1175
      %v1177 = vpop.f32.mrb[0].mxu0
      %1178 = vdwg.mxu0
      %1179 = vmatprep.subr.bf16.mxu0 0
      %1180 = vmatpush1.bf16.msra.mxu0 %v955
      %1181 = vmatprep.subr.bf16.mxu0 0
      %1182 = vmatpush1.bf16.msra.mxu0 %v956
      %1183 = vmatprep.subr.bf16.mxu0 0
      %1184 = vmatpush1.bf16.msra.mxu0 %v957
      %1185 = vmatprep.subr.bf16.mxu0 0
      %1186 = vmatpush1.bf16.msra.mxu0 %v958
      %1187 = vmatprep.subr.bf16.mxu0 0
      %1188 = vmatpush1.bf16.msra.mxu0 %v959
      %1189 = vmatprep.subr.bf16.mxu0 0
      %1190 = vmatpush1.bf16.msra.mxu0 %v960
      %1191 = vmatprep.subr.bf16.mxu0 0
      %1192 = vmatpush1.bf16.msra.mxu0 %v961
      %1193 = vmatprep.subr.bf16.mxu0 0
      %1194 = vmatpush1.bf16.msra.mxu0 %v962
      %1195 = vmatprep.subr.bf16.mxu0 0
      %1196 = vmatpush1.bf16.msra.mxu0 %v963
      %1197 = vmatprep.subr.bf16.mxu0 0
      %1198 = vmatpush1.bf16.msra.mxu0 %v964
      %1199 = vmatprep.subr.bf16.mxu0 0
      %1200 = vmatpush1.bf16.msra.mxu0 %v965
      %1201 = vmatprep.subr.bf16.mxu0 0
      %1202 = vmatpush1.bf16.msra.mxu0 %v966
      %1203 = vmatprep.subr.bf16.mxu0 0
      %1204 = vmatpush1.bf16.msra.mxu0 %v967
      %1205 = vmatprep.subr.bf16.mxu0 0
      %1206 = vmatpush1.bf16.msra.mxu0 %v968
      %1207 = vmatprep.subr.bf16.mxu0 0
      %1208 = vmatpush1.bf16.msra.mxu0 %v969
      %1209 = vmatprep.subr.bf16.mxu0 0
      %1210 = vmatpush1.bf16.msra.mxu0 %v970
      %1211 = vmatprep.mubr.bf16.mxu0 %v534
      %1212 = vmatmul.mubr.bf16.gmra.mrb[0].mxu0 %v533
      %v1213 = vpop.f32.mrb[0].mxu0
      %v1214 = vadd.f32 %v1149, %v1213
      %v1215 = vpop.f32.mrb[0].mxu0
      %v1216 = vpop.f32.mrb[0].mxu0
      %v1217 = vadd.f32 %v1152, %v1216
      %v1218 = vpop.f32.mrb[0].mxu0
      %1219 = vmatprep.mubr.bf16.mxu0 %v545
      %1220 = vmatmul.mubr.bf16.gmra.mrb[0].mxu0 %v544
      %v1221 = vpop.f32.mrb[0].mxu0
      %v1222 = vadd.f32 %v1157, %v1221
      %v1223 = vpop.f32.mrb[0].mxu0
      %v1224 = vpop.f32.mrb[0].mxu0
      %v1225 = vadd.f32 %v1160, %v1224
      %v1226 = vpop.f32.mrb[0].mxu0
      %1227 = vmatprep.mubr.bf16.mxu0 %v556
      %1228 = vmatmul.mubr.bf16.gmra.mrb[0].mxu0 %v555
      %v1229 = vpop.f32.mrb[0].mxu0
      %v1230 = vadd.f32 %v1165, %v1229
      %v1231 = vpop.f32.mrb[0].mxu0
      %v1232 = vpop.f32.mrb[0].mxu0
      %v1233 = vadd.f32 %v1168, %v1232
      %v1234 = vpop.f32.mrb[0].mxu0
      %1235 = vmatprep.mubr.bf16.mxu0 %v567
      %1236 = vmatmul.mubr.bf16.gmra.mrb[0].mxu0 %v566
      %v1237 = vpop.f32.mrb[0].mxu0
      %v1238 = vadd.f32 %v1173, %v1237
      %v1239 = vpop.f32.mrb[0].mxu0
      %v1240 = vpop.f32.mrb[0].mxu0
      %v1241 = vadd.f32 %v1176, %v1240
      %v1242 = vpop.f32.mrb[0].mxu0
      %1243 = vdwg.mxu0
      %1244 = vmatprep.subr.bf16.mxu0 0
      %1245 = vmatpush1.bf16.msra.mxu0 %v971
      %1246 = vmatprep.subr.bf16.mxu0 0
      %1247 = vmatpush1.bf16.msra.mxu0 %v972
      %1248 = vmatprep.subr.bf16.mxu0 0
      %1249 = vmatpush1.bf16.msra.mxu0 %v973
      %1250 = vmatprep.subr.bf16.mxu0 0
      %1251 = vmatpush1.bf16.msra.mxu0 %v974
      %1252 = vmatprep.subr.bf16.mxu0 0
      %1253 = vmatpush1.bf16.msra.mxu0 %v975
      %1254 = vmatprep.subr.bf16.mxu0 0
      %1255 = vmatpush1.bf16.msra.mxu0 %v976
      %1256 = vmatprep.subr.bf16.mxu0 0
      %1257 = vmatpush1.bf16.msra.mxu0 %v977
      %1258 = vmatprep.subr.bf16.mxu0 0
      %1259 = vmatpush1.bf16.msra.mxu0 %v978
      %1260 = vmatprep.subr.bf16.mxu0 0
      %1261 = vmatpush1.bf16.msra.mxu0 %v979
      %1262 = vmatprep.subr.bf16.mxu0 0
      %1263 = vmatpush1.bf16.msra.mxu0 %v980
      %1264 = vmatprep.subr.bf16.mxu0 0
      %1265 = vmatpush1.bf16.msra.mxu0 %v981
      %1266 = vmatprep.subr.bf16.mxu0 0
      %1267 = vmatpush1.bf16.msra.mxu0 %v982
      %1268 = vmatprep.subr.bf16.mxu0 0
      %1269 = vmatpush1.bf16.msra.mxu0 %v983
      %1270 = vmatprep.subr.bf16.mxu0 0
      %1271 = vmatpush1.bf16.msra.mxu0 %v984
      %1272 = vmatprep.subr.bf16.mxu0 0
      %1273 = vmatpush1.bf16.msra.mxu0 %v985
      %1274 = vmatprep.subr.bf16.mxu0 0
      %1275 = vmatpush1.bf16.msra.mxu0 %v986
      %1276 = vmatprep.mubr.bf16.mxu0 %v536
      %1277 = vmatmul.mubr.bf16.gmra.mrb[0].mxu0 %v535
      %v1278 = vpop.f32.mrb[0].mxu0
      %v1279 = vadd.f32 %v1214, %v1278
      %v1280 = vpop.f32.mrb[0].mxu0
      %v1281 = vpop.f32.mrb[0].mxu0
      %v1282 = vadd.f32 %v1217, %v1281
      %v1283 = vpop.f32.mrb[0].mxu0
      %1284 = vmatprep.mubr.bf16.mxu0 %v547
      %1285 = vmatmul.mubr.bf16.gmra.mrb[0].mxu0 %v546
      %v1286 = vpop.f32.mrb[0].mxu0
      %v1287 = vadd.f32 %v1222, %v1286
      %v1288 = vpop.f32.mrb[0].mxu0
      %v1289 = vpop.f32.mrb[0].mxu0
      %v1290 = vadd.f32 %v1225, %v1289
      %v1291 = vpop.f32.mrb[0].mxu0
      %1292 = vmatprep.mubr.bf16.mxu0 %v558
      %1293 = vmatmul.mubr.bf16.gmra.mrb[0].mxu0 %v557
      %v1294 = vpop.f32.mrb[0].mxu0
      %v1295 = vadd.f32 %v1230, %v1294
      %v1296 = vpop.f32.mrb[0].mxu0
      %v1297 = vpop.f32.mrb[0].mxu0
      %v1298 = vadd.f32 %v1233, %v1297
      %v1299 = vpop.f32.mrb[0].mxu0
      %1300 = vmatprep.mubr.bf16.mxu0 %v569
      %1301 = vmatmul.mubr.bf16.gmra.mrb[0].mxu0 %v568
      %v1302 = vpop.f32.mrb[0].mxu0
      %v1303 = vadd.f32 %v1238, %v1302
      %v1304 = vpop.f32.mrb[0].mxu0
      %v1305 = vpop.f32.mrb[0].mxu0
      %v1306 = vadd.f32 %v1241, %v1305
      %v1307 = vpop.f32.mrb[0].mxu0
      %1308 = vdwg.mxu0
      %1309 = vmatprep.subr.bf16.mxu0 0
      %1310 = vmatpush1.bf16.msra.mxu0 %v987
      %1311 = vmatprep.subr.bf16.mxu0 0
      %1312 = vmatpush1.bf16.msra.mxu0 %v988
      %1313 = vmatprep.subr.bf16.mxu0 0
      %1314 = vmatpush1.bf16.msra.mxu0 %v989
      %1315 = vmatprep.subr.bf16.mxu0 0
      %1316 = vmatpush1.bf16.msra.mxu0 %v990
      %1317 = vmatprep.subr.bf16.mxu0 0
      %1318 = vmatpush1.bf16.msra.mxu0 %v991
      %1319 = vmatprep.subr.bf16.mxu0 0
      %1320 = vmatpush1.bf16.msra.mxu0 %v992
      %1321 = vmatprep.subr.bf16.mxu0 0
      %1322 = vmatpush1.bf16.msra.mxu0 %v993
      %1323 = vmatprep.subr.bf16.mxu0 0
      %1324 = vmatpush1.bf16.msra.mxu0 %v994
      %1325 = vmatprep.subr.bf16.mxu0 0
      %1326 = vmatpush1.bf16.msra.mxu0 %v995
      %1327 = vmatprep.subr.bf16.mxu0 0
      %1328 = vmatpush1.bf16.msra.mxu0 %v996
      %1329 = vmatprep.subr.bf16.mxu0 0
      %1330 = vmatpush1.bf16.msra.mxu0 %v997
      %1331 = vmatprep.subr.bf16.mxu0 0
      %1332 = vmatpush1.bf16.msra.mxu0 %v998
      %1333 = vmatprep.subr.bf16.mxu0 0
      %1334 = vmatpush1.bf16.msra.mxu0 %v999
      %1335 = vmatprep.subr.bf16.mxu0 0
      %1336 = vmatpush1.bf16.msra.mxu0 %v1000
      %1337 = vmatprep.subr.bf16.mxu0 0
      %1338 = vmatpush1.bf16.msra.mxu0 %v1001
      %1339 = vmatprep.subr.bf16.mxu0 0
      %1340 = vmatpush1.bf16.msra.mxu0 %v1002
      %1341 = vmatprep.mubr.bf16.mxu0 %v538
      %1342 = vmatmul.mubr.bf16.gmra.mrb[0].mxu0 %v537
      %v1343 = vpop.f32.mrb[0].mxu0
      %v1344 = vadd.f32 %v1279, %v1343
      %v1345 = vpop.f32.mrb[0].mxu0
      %v1346 = vpop.f32.mrb[0].mxu0
      %v1347 = vadd.f32 %v1282, %v1346
      %v1348 = vpop.f32.mrb[0].mxu0
      %1349 = vmatprep.mubr.bf16.mxu0 %v549
      %1350 = vmatmul.mubr.bf16.gmra.mrb[0].mxu0 %v548
      %v1351 = vpop.f32.mrb[0].mxu0
      %v1352 = vadd.f32 %v1287, %v1351
      %v1353 = vpop.f32.mrb[0].mxu0
      %v1354 = vpop.f32.mrb[0].mxu0
      %v1355 = vadd.f32 %v1290, %v1354
      %v1356 = vpop.f32.mrb[0].mxu0
      %1357 = vmatprep.mubr.bf16.mxu0 %v560
      %1358 = vmatmul.mubr.bf16.gmra.mrb[0].mxu0 %v559
      %v1359 = vpop.f32.mrb[0].mxu0
      %v1360 = vadd.f32 %v1295, %v1359
      %v1361 = vpop.f32.mrb[0].mxu0
      %v1362 = vpop.f32.mrb[0].mxu0
      %v1363 = vadd.f32 %v1298, %v1362
      %v1364 = vpop.f32.mrb[0].mxu0
      %1365 = vmatprep.mubr.bf16.mxu0 %v571
      %1366 = vmatmul.mubr.bf16.gmra.mrb[0].mxu0 %v570
      %v1367 = vpop.f32.mrb[0].mxu0
      %v1368 = vadd.f32 %v1303, %v1367
      %v1369 = vpop.f32.mrb[0].mxu0
      %v1370 = vpop.f32.mrb[0].mxu0
      %v1371 = vadd.f32 %v1306, %v1370
      %v1372 = vpop.f32.mrb[0].mxu0
      %1373 = vdwg.mxu0
      %1374 = vmatprep.subr.bf16.mxu0 0
      %1375 = vmatpush1.bf16.msra.mxu0 %v1003
      %1376 = vmatprep.subr.bf16.mxu0 0
      %1377 = vmatpush1.bf16.msra.mxu0 %v1004
      %1378 = vmatprep.subr.bf16.mxu0 0
      %1379 = vmatpush1.bf16.msra.mxu0 %v1005
      %1380 = vmatprep.subr.bf16.mxu0 0
      %1381 = vmatpush1.bf16.msra.mxu0 %v1006
      %1382 = vmatprep.subr.bf16.mxu0 0
      %1383 = vmatpush1.bf16.msra.mxu0 %v1007
      %1384 = vmatprep.subr.bf16.mxu0 0
      %1385 = vmatpush1.bf16.msra.mxu0 %v1008
      %1386 = vmatprep.subr.bf16.mxu0 0
      %1387 = vmatpush1.bf16.msra.mxu0 %v1009
      %1388 = vmatprep.subr.bf16.mxu0 0
      %1389 = vmatpush1.bf16.msra.mxu0 %v1010
      %1390 = vmatprep.subr.bf16.mxu0 0
      %1391 = vmatpush1.bf16.msra.mxu0 %v1011
      %1392 = vmatprep.subr.bf16.mxu0 0
      %1393 = vmatpush1.bf16.msra.mxu0 %v1012
      %1394 = vmatprep.subr.bf16.mxu0 0
      %1395 = vmatpush1.bf16.msra.mxu0 %v1013
      %1396 = vmatprep.subr.bf16.mxu0 0
      %1397 = vmatpush1.bf16.msra.mxu0 %v1014
      %1398 = vmatprep.subr.bf16.mxu0 0
      %1399 = vmatpush1.bf16.msra.mxu0 %v1015
      %1400 = vmatprep.subr.bf16.mxu0 0
      %1401 = vmatpush1.bf16.msra.mxu0 %v1016
      %1402 = vmatprep.subr.bf16.mxu0 0
      %1403 = vmatpush1.bf16.msra.mxu0 %v1017
      %1404 = vmatprep.subr.bf16.mxu0 0
      %1405 = vmatpush1.bf16.msra.mxu0 %v1018
      %1406 = vmatprep.mubr.bf16.mxu0 %v540
      %1407 = vmatmul.mubr.bf16.gmra.mrb[0].mxu0 %v539
      %v1408 = vpop.f32.mrb[0].mxu0
      %v1409 = vadd.f32 %v1344, %v1408
      %v1410 = vpop.f32.mrb[0].mxu0
      %v1411 = vpop.f32.mrb[0].mxu0
      %v1412 = vadd.f32 %v1347, %v1411
      %v1413 = vpop.f32.mrb[0].mxu0
      %1414 = vmatprep.mubr.bf16.mxu0 %v551
      %1415 = vmatmul.mubr.bf16.gmra.mrb[0].mxu0 %v550
      %v1416 = vpop.f32.mrb[0].mxu0
      %v1417 = vadd.f32 %v1352, %v1416
      %v1418 = vpop.f32.mrb[0].mxu0
      %v1419 = vpop.f32.mrb[0].mxu0
      %v1420 = vadd.f32 %v1355, %v1419
      %v1421 = vpop.f32.mrb[0].mxu0
      %1422 = vmatprep.mubr.bf16.mxu0 %v562
      %1423 = vmatmul.mubr.bf16.gmra.mrb[0].mxu0 %v561
      %v1424 = vpop.f32.mrb[0].mxu0
      %v1425 = vadd.f32 %v1360, %v1424
      %v1426 = vpop.f32.mrb[0].mxu0
      %v1427 = vpop.f32.mrb[0].mxu0
      %v1428 = vadd.f32 %v1363, %v1427
      %v1429 = vpop.f32.mrb[0].mxu0
      %1430 = vmatprep.mubr.bf16.mxu0 %v573
      %1431 = vmatmul.mubr.bf16.gmra.mrb[0].mxu0 %v572
      %v1432 = vpop.f32.mrb[0].mxu0
      %v1433 = vadd.f32 %v1368, %v1432
      %v1434 = vpop.f32.mrb[0].mxu0
      %v1435 = vpop.f32.mrb[0].mxu0
      %v1436 = vadd.f32 %v1371, %v1435
      %v1437 = vpop.f32.mrb[0].mxu0
      %1438 = vdwg.mxu0
      %1439 = vmatprep.subr.bf16.mxu0 0
      %1440 = vmatpush1.bf16.msra.mxu0 %v1019
      %1441 = vmatprep.subr.bf16.mxu0 0
      %1442 = vmatpush1.bf16.msra.mxu0 0
      %1443 = vmatprep.subr.bf16.mxu0 0
      %1444 = vmatpush1.bf16.msra.mxu0 0
      %1445 = vmatprep.subr.bf16.mxu0 0
      %1446 = vmatpush1.bf16.msra.mxu0 0
      %1447 = vmatprep.subr.bf16.mxu0 0
      %1448 = vmatpush1.bf16.msra.mxu0 0
      %1449 = vmatprep.subr.bf16.mxu0 0
      %1450 = vmatpush1.bf16.msra.mxu0 0
      %1451 = vmatprep.subr.bf16.mxu0 0
      %1452 = vmatpush1.bf16.msra.mxu0 0
      %1453 = vmatprep.subr.bf16.mxu0 0
      %1454 = vmatpush1.bf16.msra.mxu0 0
      %1455 = vmatprep.subr.bf16.mxu0 0
      %1456 = vmatpush1.bf16.msra.mxu0 0
      %1457 = vmatprep.subr.bf16.mxu0 0
      %1458 = vmatpush1.bf16.msra.mxu0 0
      %1459 = vmatprep.subr.bf16.mxu0 0
      %1460 = vmatpush1.bf16.msra.mxu0 0
      %1461 = vmatprep.subr.bf16.mxu0 0
      %1462 = vmatpush1.bf16.msra.mxu0 0
      %1463 = vmatprep.subr.bf16.mxu0 0
      %1464 = vmatpush1.bf16.msra.mxu0 0
      %1465 = vmatprep.subr.bf16.mxu0 0
      %1466 = vmatpush1.bf16.msra.mxu0 0
      %1467 = vmatprep.subr.bf16.mxu0 0
      %1468 = vmatpush1.bf16.msra.mxu0 0
      %1469 = vmatprep.subr.bf16.mxu0 0
      %1470 = vmatpush1.bf16.msra.mxu0 0
      %1471 = vmatprep.mubr.bf16.mxu0 0
      %1472 = vmatmul.mubr.bf16.gmra.mrb[0].mxu0 %v1103
      %v1473 = vpop.f32.mrb[0].mxu0
      %v1474 = vadd.f32 %v1409, %v1473
      %v1475 = vpop.f32.mrb[0].mxu0
      %v1476 = vpop.f32.mrb[0].mxu0
      %v1477 = vadd.f32 %v1412, %v1476
      %v1478 = vpop.f32.mrb[0].mxu0
      %1479 = vmatprep.mubr.bf16.mxu0 0
      %1480 = vmatmul.mubr.bf16.gmra.mrb[0].mxu0 %v1106
      %v1481 = vpop.f32.mrb[0].mxu0
      %v1482 = vadd.f32 %v1417, %v1481
      %v1483 = vpop.f32.mrb[0].mxu0
      %v1484 = vpop.f32.mrb[0].mxu0
      %v1485 = vadd.f32 %v1420, %v1484
      %v1486 = vpop.f32.mrb[0].mxu0
      %1487 = vmatprep.mubr.bf16.mxu0 0
      %1488 = vmatmul.mubr.bf16.gmra.mrb[0].mxu0 %v1109
      %v1489 = vpop.f32.mrb[0].mxu0
      %v1490 = vadd.f32 %v1425, %v1489
      %v1491 = vpop.f32.mrb[0].mxu0
      %v1492 = vpop.f32.mrb[0].mxu0
      %v1493 = vadd.f32 %v1428, %v1492
      %v1494 = vpop.f32.mrb[0].mxu0
      %1495 = vmatprep.mubr.bf16.mxu0 0
      %1496 = vmatmul.mubr.bf16.gmra.mrb[0].mxu0 %v1112
      %v1497 = vpop.f32.mrb[0].mxu0
      %v1498 = vadd.f32 %v1433, %v1497
      %v1499 = vpop.f32.mrb[0].mxu0
      %v1500 = vpop.f32.mrb[0].mxu0
      %v1501 = vadd.f32 %v1436, %v1500
      %v1502 = vpop.f32.mrb[0].mxu0
      %1503 = vdwg.mxu0
      %v1504 = vmax.f32 %v1474, 0.0
      %v1505 = vmax.f32 %v1477, 0.0
      %v1506 = vmax.f32 %v1482, 0.0
      %v1507 = vmax.f32 %v1485, 0.0
      %v1508 = vmax.f32 %v1490, 0.0
      %v1509 = vmax.f32 %v1493, 0.0
      %v1510 = vmax.f32 %v1498, 0.0
      %v1511 = vmax.f32 %v1501, 0.0
      %1512 = vst.msk [vmem:[%s175] sm:$0xff] %vm1101, %v1504
      %1513 = vst.msk [vmem:[%s175 + $0x8] sm:$0xff] %vm1101, %v1505
      %1514 = vst.msk [vmem:[%s175 + $0x10] sm:$0xff] %vm1101, %v1506
      %1515 = vst.msk [vmem:[%s175 + $0x18] sm:$0xff] %vm1101, %v1507
      %1516 = vst.msk [vmem:[%s175 + $0x20] sm:$0xff] %vm1101, %v1508
      %1517 = vst.msk [vmem:[%s175 + $0x28] sm:$0xff] %vm1101, %v1509
      %1518 = vst.msk [vmem:[%s175 + $0x30] sm:$0xff] %vm1101, %v1510
      %1519 = vst.msk [vmem:[%s175 + $0x38] sm:$0xff] %vm1101, %v1511
      %s1520 = smul.u32 8, %s14
      %p1521 = scmp.lt.s32.totalorder %s1520, 15
      %s1522 = scalar_select %p1521, %s1520, 15
      %s1523 = smul.addr %s1522, 8
      %s1524 = scalar_lea.vmem %s3, %s1523
      // Predicated region
      $region33: #{tpu_custom_call.1} parent=31 // pred_check
        %p1525 = pneg %p100
      $region34: #{tpu_custom_call.1} parent=31 // pred_check_branch
        %1527 = sbr.rel (%p1525) target = $region36
      $region35: #{tpu_custom_call.1} parent=31 // pred_region
        %s1528 = smul.u32 8, %s14
      $region36: #{tpu_custom_call.1} parent=31 // pred_fallthru
        _
    $region32: #{tpu_custom_call.1} parent=5 // pred_fallthru
      _
    %p1529 = scmp.le.s32.totalorder 2, %s9
    // Predicated region
    $region37: #{tpu_custom_call.1} parent=5 // pred_check
      %p1530 = pneg %p1529
    $region38: #{tpu_custom_call.1} parent=5 // pred_check_branch
      %1532 = sbr.rel (%p1530) target = $region40
    $region39: #{tpu_custom_call.1} parent=5 // pred_region
      %s1533 = ssub.s32 %s9, 2
      // Predicated region
      $region41: #{tpu_custom_call.1} parent=39 // pred_check
        %p1534 = pneg %p106
      $region42: #{tpu_custom_call.1} parent=39 // pred_check_branch
        %1536 = sbr.rel (%p1534) target = $region44
      $region43: #{tpu_custom_call.1} parent=39 // pred_region
        %s1537 = smul.u32 8, %s15
        %p1538 = scmp.lt.s32.totalorder %s1537, 15
        %s1539 = scalar_select %p1538, %s1537, 15
        %s1540 = smul.addr %s1539, 8
        %s1541 = scalar_lea.vmem %s3, %s1540
      $region44: #{tpu_custom_call.1} parent=39 // pred_fallthru
        _
    $region40: #{tpu_custom_call.1} parent=5 // pred_fallthru
      _
  $region6: #{tpu_custom_call.1} parent=0 // loop_footer
    %s13 = sadd.s32 1, %s9
  $region7: #{tpu_custom_call.1} parent=0 // loop_footer_branch
    %8 = sbr.rel target = $region3
  $region8: #{tpu_custom_call.1} parent=0 // loop_exit
    _

</llo_original>
